<compile_context>
chip_gen: v7x
topology: tpu7x:2x2x1
jax: 0.10.0
libtpu: 0.0.40
codegen_flags: <defaults>
</compile_context>

<pallas_src>
import jax
import jax.numpy as jnp
from jax.experimental import pallas as pl
from jax.experimental.pallas import tpu as pltpu


# ~2 MiB input block => in + 2*out, double-buffered = ~12 MiB VMEM footprint.
_TARGET_BLOCK_BYTES = 2 * 1024 * 1024
_VMEM_LIMIT_BYTES = 32 * 1024 * 1024


def _crelu_kernel(x_ref, o_ref):
    # Slab path:     x_ref (TR, 128),  o_ref (2, TR, 128)
    # Fallback path: x_ref (C, HW_T),  o_ref (2, C, HW_T)
    x = x_ref[...]
    zero = jnp.zeros((), dtype=x.dtype)
    o_ref[0] = jnp.maximum(x, zero)     # relu(x)   -> first half of channels
    o_ref[1] = jnp.maximum(-x, zero)    # relu(-x)  -> second half of channels


def _largest_divisor_tile(extent, cap, step):
    """Largest multiple of `step` <= cap that divides `extent`.  Falls back to
    the largest multiple of `step` <= cap (masked remainder tile) if no divisor
    is found in [cap/2, cap], so tiles never shrink below half the target."""
    cap = max(step, (cap // step) * step)
    t = cap
    while t >= max(step, cap // 2):
        if extent % t == 0:
            return int(t)
        t -= step
    return int(cap)


def _pick_row_tile(total_rows, itemsize, n):
    """Row tile for the dense (rows, 128) slab layout: multiple of the sublane
    packing count (8 f32 / 16 bf16 / 32 int8) or full extent; input block
    ~<= 2 MiB; prefers an exact divisor; splits into >=2 tiles when N == 1 so
    both v7x TensorCores get work."""
    sub = max(8, 32 // itemsize)
    if total_rows * 128 * itemsize <= _TARGET_BLOCK_BYTES:
        if n == 1 and total_rows >= 2 * sub:
            return _largest_divisor_tile(total_rows, total_rows // 2, sub)
        return int(total_rows)
    cap_rows = _TARGET_BLOCK_BYTES // (128 * itemsize)
    return _largest_divisor_tile(total_rows, cap_rows, sub)


def _pick_hw_tile(c, hw, itemsize, n):
    """Lane tile for the (N, 2, C, HW) fallback layout: multiple of 128 or full
    extent, sized so the input block stays ~<= 2 MiB, preferring a divisor."""
    if c * hw * itemsize <= _TARGET_BLOCK_BYTES:
        if n == 1 and hw >= 2 * 128:
            return _largest_divisor_tile(hw, hw // 2, 128)
        return int(hw)
    cap_lanes = _TARGET_BLOCK_BYTES // (c * itemsize)
    return _largest_divisor_tile(hw, cap_lanes, 128)


def crelu(x):
    """x: (N, C, H, W) -> (N, 2C, H, W), matching torch CReLU forward."""
    n, c, h, w = x.shape
    hw = h * w
    total = c * hw
    itemsize = jnp.dtype(x.dtype).itemsize

    if total % 128 == 0:
        # Dense slab layout: sample -> (rows, 128), output -> (2, rows, 128).
        rows = total // 128
        tr = _pick_row_tile(rows, itemsize, n)
        grid = (n, pl.cdiv(rows, tr))
        x_in = x.reshape(n, rows, 128)
        out_shape = jax.ShapeDtypeStruct((n, 2, rows, 128), x.dtype)
        in_spec = pl.BlockSpec((pl.Squeezed(), tr, 128),
                               lambda i, j: (i, j, 0))
        out_spec = pl.BlockSpec((pl.Squeezed(), 2, tr, 128),
                                lambda i, j: (i, 0, j, 0))
    else:
        # Fallback layout when C*H*W isn't 128-divisible.
        hw_t = _pick_hw_tile(c, hw, itemsize, n)
        grid = (n, pl.cdiv(hw, hw_t))
        x_in = x.reshape(n, c, hw)
        out_shape = jax.ShapeDtypeStruct((n, 2, c, hw), x.dtype)
        in_spec = pl.BlockSpec((pl.Squeezed(), c, hw_t),
                               lambda i, j: (i, 0, j))
        out_spec = pl.BlockSpec((pl.Squeezed(), 2, c, hw_t),
                                lambda i, j: (i, 0, 0, j))

    out = pl.pallas_call(
        _crelu_kernel,
        out_shape=out_shape,
        grid_spec=pltpu.PrefetchScalarGridSpec(
            num_scalar_prefetch=0,
            grid=grid,
            in_specs=[in_spec],
            out_specs=out_spec,
        ),
        compiler_params=pltpu.CompilerParams(
            dimension_semantics=("parallel", "parallel"),
            vmem_limit_bytes=_VMEM_LIMIT_BYTES,
        ),
        cost_estimate=pl.CostEstimate(
            flops=2 * n * total,
            transcendentals=0,
            bytes_accessed=3 * n * total * itemsize,  # read x, write 2x
        ),
    )(x_in)

    # Free row-major metadata reshape; preserves torch.cat((x, -x), dim=1)
    # channel ordering exactly.
    return out.reshape(n, 2 * c, h, w)


def _ref(x):
    return jnp.maximum(jnp.concatenate([x, -x], axis=1), 0.0)


if __name__ == "__main__":
    key = jax.random.PRNGKey(0)

    # Main test: NCHW, batch=2, channels=4, spatial=16x16 (slab path).
    x = jax.random.normal(key, (2, 4, 16, 16), dtype=jnp.float32)
    y = crelu(x)
    jax.block_until_ready(y)
    assert y.shape == (2, 8, 16, 16)
    assert jnp.allclose(y, _ref(x)), "mismatch vs reference (slab path)"

    # Fallback path: C*H*W not divisible by 128.
    k1, k2 = jax.random.split(key)
    x2 = jax.random.normal(k1, (2, 3, 5, 7), dtype=jnp.float32)
    y2 = crelu(x2)
    jax.block_until_ready(y2)
    assert y2.shape == (2, 6, 5, 7)
    assert jnp.allclose(y2, _ref(x2)), "mismatch vs reference (fallback path)"

    # N == 1: row axis is split into >=2 tiles (megacore), multi-step grid.
    x3 = jax.random.normal(k2, (1, 8, 32, 32), dtype=jnp.float32)
    y3 = crelu(x3)
    jax.block_until_ready(y3)
    assert y3.shape == (1, 16, 32, 32)
    assert jnp.allclose(y3, _ref(x3)), "mismatch vs reference (multi-tile path)"

    print("KERNEL_OK")
</pallas_src>

<mosaic_0001>
module attributes {stable_mosaic.version = 11 : i64} {
  func.func @_crelu_kernel(%arg0: i32, %arg1: i32, %arg2: memref<1x8x128xf32, #tpu.memory_space<vmem>>, %arg3: memref<1x2x8x128xf32, #tpu.memory_space<vmem>>) attributes {dimension_semantics = [#tpu.dimension_semantics<parallel>, #tpu.dimension_semantics<parallel>], iteration_bounds = array<i64: 2, 1>, scalar_prefetch = 0 : i64, scratch_operands = 0 : i64, tpu.core_type = #tpu.core_type<tc>, window_params = [{transform_indices = @transform_0, window_bounds = array<i64: 1, 8, 128>}, {transform_indices = @transform_1, window_bounds = array<i64: 1, 2, 8, 128>}]} {
    %c0 = arith.constant 0 : index
    %c0_0 = arith.constant 0 : index
    %c0_1 = arith.constant 0 : index
    %0 = vector.load %arg2[%c0, %c0_0, %c0_1] : memref<1x8x128xf32, #tpu.memory_space<vmem>>, vector<1x8x128xf32>
    %1 = vector.shape_cast %0 : vector<1x8x128xf32> to vector<8x128xf32>
    %cst = arith.constant 0.000000e+00 : f32
    %2 = vector.broadcast %cst : f32 to vector<8x128xf32>
    %3 = arith.maximumf %1, %2 : vector<8x128xf32>
    %c0_2 = arith.constant 0 : index
    %c0_3 = arith.constant 0 : index
    %c0_4 = arith.constant 0 : index
    %c0_5 = arith.constant 0 : index
    %4 = vector.load %arg3[%c0_2, %c0_3, %c0_4, %c0_5] : memref<1x2x8x128xf32, #tpu.memory_space<vmem>>, vector<1x1x8x128xf32>
    %5 = vector.shape_cast %4 : vector<1x1x8x128xf32> to vector<8x128xf32>
    %6 = vector.shape_cast %3 : vector<8x128xf32> to vector<1x1x8x128xf32>
    tpu.vector_store %arg3[%c0_2, %c0_3, %c0_4, %c0_5], %6 {strides = array<i32>} : memref<1x2x8x128xf32, #tpu.memory_space<vmem>>, vector<1x1x8x128xf32>,
    %cst_6 = arith.constant 0.000000e+00 : f32
    %7 = vector.broadcast %cst_6 : f32 to vector<8x128xf32>
    %8 = arith.subf %7, %1 : vector<8x128xf32>
    %cst_7 = arith.constant 0.000000e+00 : f32
    %9 = vector.broadcast %cst_7 : f32 to vector<8x128xf32>
    %10 = arith.maximumf %8, %9 : vector<8x128xf32>
    %c0_8 = arith.constant 0 : index
    %c1 = arith.constant 1 : index
    %c0_9 = arith.constant 0 : index
    %c0_10 = arith.constant 0 : index
    %11 = vector.load %arg3[%c0_8, %c1, %c0_9, %c0_10] : memref<1x2x8x128xf32, #tpu.memory_space<vmem>>, vector<1x1x8x128xf32>
    %12 = vector.shape_cast %11 : vector<1x1x8x128xf32> to vector<8x128xf32>
    %13 = vector.shape_cast %10 : vector<8x128xf32> to vector<1x1x8x128xf32>
    tpu.vector_store %arg3[%c0_8, %c1, %c0_9, %c0_10], %13 {strides = array<i32>} : memref<1x2x8x128xf32, #tpu.memory_space<vmem>>, vector<1x1x8x128xf32>,
    return
  }
  func.func @transform_0(%arg0: i32, %arg1: i32) -> (i32, i32, i32) {
    %c0_i32 = arith.constant 0 : i32
    %c0_i32_0 = arith.constant 0 : i32
    return %arg0, %arg1, %c0_i32 : i32, i32, i32
  }
  func.func @transform_1(%arg0: i32, %arg1: i32) -> (i32, i32, i32, i32) {
    %c0_i32 = arith.constant 0 : i32
    %c0_i32_0 = arith.constant 0 : i32
    %c0_i32_1 = arith.constant 0 : i32
    return %arg0, %c0_i32, %arg1, %c0_i32_0 : i32, i32, i32, i32
  }
}

</mosaic_0001>

<llo_original>
// kernel: tpu_custom_call.1
$region0: #{tpu_custom_call.1}
  #allocation0 [shape = 'u32[]', space=smem, size = 0x4, offset = 0x4, fixed_abs, tag = 'smem constant byte address 0x4 - core index']
  #allocation1 [shape = 'u32[144,128]{1,0:T(1,128)}', space=vmem, size = 0x12000, scoped, tag = 'internal scratch']
  %s0 = inlined_call_operand.hbm [shape: f32[2,8,128], index: 0, kind: input, shape index: {}]
  %s1 = inlined_call_operand.hbm [shape: f32[2,2,8,128], index: 1, kind: output, shape index: {}]
  %s2 = sld [smem:[#allocation0]]
  $region41: #{tpu_custom_call.1} parent=0
    _
  %s4 = ssub.s32 1, %s2
  %s5 = scalar_select 0, %s4, %s2
  $region1: #{tpu_custom_call.1} parent=0
    #allocation2 [shape = 'u8[8192]{0}', space=vmem, size = 0x2000, scoped, tag = 'input window, operand 0']
    #allocation3 [shape = 's32[2]{0}', space=sflag, size = 0x8, scoped, tag = 'scoped memory for tpu_custom_call.1']
    #allocation4 [shape = 's32[2]{0}', space=sflag, size = 0x8, scoped, tag = 'scoped memory for tpu_custom_call.1']
    #allocation5 [shape = 'u8[16384]{0}', space=vmem, size = 0x4000, scoped, tag = 'output window, operand 0']
    %6 = vsyncpa [#allocation3], 0
    %s7 = scalar_lea.sflag [#allocation3], 1
    %8 = vsyncpa %s7, 0
    %9 = vsyncpa [#allocation4], 0
    %s10 = scalar_lea.sflag [#allocation4], 1
    %11 = vsyncpa %s10, 0
    loop: start=0, step=1, limit=4
    $region2: #{tpu_custom_call.1} parent=1 // loop_pre_header
      _
    $region3: #{tpu_custom_call.1} parent=1 // loop_header
      %s13 = sphi 0, %s17
      %p14 = scmp.ge.s32.totalorder %s13, 4
      %s20 = sphi 0, %s32
      %s21 = sphi 0, %s28
      %s22 = sphi 0, %s20
      %s23 = sphi 0, %s21
      %s24 = sphi 0, %s22
      %s25 = sphi 0, %s23
      %s37 = sphi 0, %s39
      %s40 = sphi 0, %s37
      %s41 = sphi 0, %s40
      %s57 = sphi 0, %s41
      %s65 = sphi 0, %s67
      %s68 = sphi 0, %s65
      %s69 = sphi 0, %s68
      %s85 = sphi 0, %s69
    $region4: #{tpu_custom_call.1} parent=1 // loop_header_branch
      %16 = sbr.rel (%p14) target = $region8
    $region5: #{tpu_custom_call.1} parent=1 // loop_body
      %s18 = ssub.s32 %s13, 1
      %s19 = ssub.s32 %s13, 2
      %s26 = sadd.s32 1, %s21
      %p27 = scmp.ge.s32.totalorder %s26, 1
      %s28 = scalar_select %p27, 0, %s26
      %s29 = sadd.s32 1, %s20
      %s30 = scalar_select %p27, %s29, %s20
      %p31 = scmp.ge.s32.totalorder %s30, 2
      %s32 = scalar_select %p31, 0, %s30
      %s33 = ssub.s32 %s20, %s32
      %s34 = ssub.s32 %s21, %s28
      %s35 = sor.u32 %s33, %s34
      %p36 = scmp.eq.s32.totalorder %s35, 0
      %s38 = sadd.s32 %s37, 1
      %s39 = scalar_select %p36, %s37, %s38
      %p42 = pneg %p36
      %p43 = scmp.eq.s32.totalorder %s13, 1
      %p44 = por %p42, %p43
      %p45 = scmp.ne.s32.totalorder %s37, %s40
      %p46 = scmp.eq.s32.totalorder %s13, 0
      %p47 = por %p45, %p46
      %p48 = scmp.ne.s32.totalorder %s37, %s40
      %p49 = scmp.eq.s32.totalorder %s18, 1
      %p50 = por %p48, %p49
      %p51 = scmp.ne.s32.totalorder %s40, %s41
      %p52 = scmp.eq.s32.totalorder %s18, 0
      %p53 = por %p51, %p52
      %p54 = scmp.ne.s32.totalorder %s40, %s41
      %p55 = scmp.eq.s32.totalorder %s19, 1
      %p56 = por %p54, %p55
      %p58 = scmp.ne.s32.totalorder %s41, %s57
      %p59 = scmp.eq.s32.totalorder %s19, 0
      %p60 = por %p58, %p59
      %s61 = ssub.s32 %s20, %s32
      %s62 = ssub.s32 %s21, %s28
      %s63 = sor.u32 %s61, %s62
      %p64 = scmp.eq.s32.totalorder %s63, 0
      %s66 = sadd.s32 %s65, 1
      %s67 = scalar_select %p64, %s65, %s66
      %p70 = pneg %p64
      %p71 = scmp.eq.s32.totalorder %s13, 1
      %p72 = por %p70, %p71
      %p73 = scmp.ne.s32.totalorder %s65, %s68
      %p74 = scmp.eq.s32.totalorder %s13, 0
      %p75 = por %p73, %p74
      %p76 = scmp.ne.s32.totalorder %s65, %s68
      %p77 = scmp.eq.s32.totalorder %s18, 1
      %p78 = por %p76, %p77
      %p79 = scmp.ne.s32.totalorder %s68, %s69
      %p80 = scmp.eq.s32.totalorder %s18, 0
      %p81 = por %p79, %p80
      %p82 = scmp.ne.s32.totalorder %s68, %s69
      %p83 = scmp.eq.s32.totalorder %s19, 1
      %p84 = por %p82, %p83
      %p86 = scmp.ne.s32.totalorder %s69, %s85
      %p87 = scmp.eq.s32.totalorder %s19, 0
      %p88 = por %p86, %p87
      %p89 = scmp.le.s32.totalorder 1, %s13
      %p90 = scmp.lt.s32.totalorder %s13, 3
      %p91 = pnand %p89, %p90
      %p92 = pneg %p91
      // Predicated region
      $region9: #{tpu_custom_call.1} parent=5 // pred_check
        _
      $region10: #{tpu_custom_call.1} parent=5 // pred_check_branch
        %94 = sbr.rel (%p91) target = $region12
      $region11: #{tpu_custom_call.1} parent=5 // pred_region
        %s95 = ssub.s32 %s13, 1
      $region12: #{tpu_custom_call.1} parent=5 // pred_fallthru
        _
      %p96 = scmp.lt.s32.totalorder %s13, 2
      // Predicated region
      $region13: #{tpu_custom_call.1} parent=5 // pred_check
        %p97 = pneg %p96
      $region14: #{tpu_custom_call.1} parent=5 // pred_check_branch
        %99 = sbr.rel (%p97) target = $region16
      $region15: #{tpu_custom_call.1} parent=5 // pred_region
        // Predicated region
        $region17: #{tpu_custom_call.1} parent=15 // pred_check
          %p100 = pneg %p47
        $region18: #{tpu_custom_call.1} parent=15 // pred_check_branch
          %102 = sbr.rel (%p100) target = $region20
        $region19: #{tpu_custom_call.1} parent=15 // pred_region
          %s103 = sand.u32 %s37, 1
          %s104 = scalar_lea.sflag [#allocation3], %s103
          %s105 = sand.u32 %s37, 1
          %s106 = smul.addr %s105, 8
          %s107 = scalar_lea.vmem [#allocation2], %s106
          %s109 = ssub.s32 128, 128
          %110 = vsyncadd %s104, %s109
          %s111 = sadd.s32 %s21, %s20
          %s112 = smul.addr %s111, 128
          %s113 = scalar_lea.hbm %s0, %s112
          %s115 = sshll.u32 %s107, 4
          %s116 = int_to_ptr.vmem [resolvable:$true] %s115
          %118 = dma.hbm_to_vmem [thread:$0]  %s113, 128, %s116, %s104
        $region20: #{tpu_custom_call.1} parent=15 // pred_fallthru
          _
      $region16: #{tpu_custom_call.1} parent=5 // pred_fallthru
        _
      %p119 = scmp.le.s32.totalorder 1, %s13
      %p120 = scmp.lt.s32.totalorder %s13, 3
      %p121 = pnand %p119, %p120
      %p122 = pneg %p121
      // Predicated region
      $region21: #{tpu_custom_call.1} parent=5 // pred_check
        _
      $region22: #{tpu_custom_call.1} parent=5 // pred_check_branch
        %124 = sbr.rel (%p121) target = $region24
      $region23: #{tpu_custom_call.1} parent=5 // pred_region
        %s125 = ssub.s32 %s13, 1
        %s126 = sand.u32 %s40, 1
        %s127 = scalar_lea.sflag [#allocation3], %s126
        %s128 = sand.u32 %s40, 1
        %s129 = smul.addr %s128, 8
        %s130 = scalar_lea.vmem [#allocation2], %s129
        // Predicated region
        $region25: #{tpu_custom_call.1} parent=23 // pred_check
          %p131 = pneg %p53
        $region26: #{tpu_custom_call.1} parent=23 // pred_check_branch
          %133 = sbr.rel (%p131) target = $region28
        $region27: #{tpu_custom_call.1} parent=23 // pred_region
          %134 = dma.done %s127, 128
        $region28: #{tpu_custom_call.1} parent=23 // pred_fallthru
          _
        %s135 = sand.u32 %s40, 1
        %s136 = scalar_lea.sflag [#allocation3], %s135
        %s137 = sand.u32 %s40, 1
        %s138 = smul.addr %s137, 8
        %s139 = scalar_lea.vmem [#allocation2], %s138
        %p140 = pneg %p53
        %p141 = pneg %p50
        %p142 = pneg %p81
        %p143 = pneg %p78
        %s144 = sand.u32 %s68, 1
        %s145 = scalar_lea.sflag [#allocation4], %s144
        %s146 = sand.u32 %s68, 1
        %s147 = smul.addr %s146, 16
        %s148 = scalar_lea.vmem [#allocation5], %s147
        %v149 = vld [vmem:[%s130] sm:$0xff]
        %v150 = vmax.f32 %v149, 0.0
        %151 = vst [vmem:[%s148] sm:$0xff] %v150
        %v152 = vsub.f32 0.0, %v149
        %v153 = vmax.f32 %v152, 0.0
        %s154 = scalar_lea.vmem %s148, 8 [#allocation5]
        %155 = vst [vmem:[%s154] sm:$0xff] %v153
        %s156 = sand.u32 %s68, 1
        %s157 = scalar_lea.sflag [#allocation4], %s156
        %s158 = sand.u32 %s68, 1
        %s159 = smul.addr %s158, 16
        %s160 = scalar_lea.vmem [#allocation5], %s159
        // Predicated region
        $region29: #{tpu_custom_call.1} parent=23 // pred_check
          %p161 = pneg %p78
        $region30: #{tpu_custom_call.1} parent=23 // pred_check_branch
          %163 = sbr.rel (%p161) target = $region32
        $region31: #{tpu_custom_call.1} parent=23 // pred_region
          %s165 = ssub.s32 256, 256
          %166 = vsyncadd %s157, %s165
          %s167 = smul.addr %s22, 2
          %s168 = sadd.s32 %s23, %s167
          %s169 = smul.addr %s168, 128
          %s170 = scalar_lea.hbm %s1, %s169
          %s171 = sshll.u32 %s160, 4
          %s172 = int_to_ptr.vmem [resolvable:$true] %s171
          %177 = dma.vmem_to_hbm [thread:$0]  %s172, 256, %s170, %s157, 128, 128, 8
        $region32: #{tpu_custom_call.1} parent=23 // pred_fallthru
          _
      $region24: #{tpu_custom_call.1} parent=5 // pred_fallthru
        _
      %p178 = scmp.le.s32.totalorder 2, %s13
      // Predicated region
      $region33: #{tpu_custom_call.1} parent=5 // pred_check
        %p179 = pneg %p178
      $region34: #{tpu_custom_call.1} parent=5 // pred_check_branch
        %181 = sbr.rel (%p179) target = $region36
      $region35: #{tpu_custom_call.1} parent=5 // pred_region
        %s182 = ssub.s32 %s13, 2
        // Predicated region
        $region37: #{tpu_custom_call.1} parent=35 // pred_check
          %p183 = pneg %p84
        $region38: #{tpu_custom_call.1} parent=35 // pred_check_branch
          %185 = sbr.rel (%p183) target = $region40
        $region39: #{tpu_custom_call.1} parent=35 // pred_region
          %s186 = sand.u32 %s69, 1
          %s187 = scalar_lea.sflag [#allocation4], %s186
          %s188 = sand.u32 %s69, 1
          %s189 = smul.addr %s188, 16
          %s190 = scalar_lea.vmem [#allocation5], %s189
          %191 = dma.done %s187, 256
        $region40: #{tpu_custom_call.1} parent=35 // pred_fallthru
          _
      $region36: #{tpu_custom_call.1} parent=5 // pred_fallthru
        _
    $region6: #{tpu_custom_call.1} parent=1 // loop_footer
      %s17 = sadd.s32 1, %s13
    $region7: #{tpu_custom_call.1} parent=1 // loop_footer_branch
      %12 = sbr.rel target = $region3
    $region8: #{tpu_custom_call.1} parent=1 // loop_exit
      _
    %192 = vsyncpa [#allocation3], 1
    %s193 = scalar_lea.sflag [#allocation3], 1
    %194 = vsyncpa %s193, 1
    %195 = vsyncpa [#allocation4], 1
    %s196 = scalar_lea.sflag [#allocation4], 1
    %197 = vsyncpa %s196, 1

</llo_original>
